<compile_context>
chip_gen: v6e
topology: v6e:2x2x1
jax: 0.10.0
libtpu: 0.0.40
codegen_flags: <defaults>
</compile_context>

<pallas_src>
import functools

import jax
import jax.numpy as jnp
from jax.experimental import pallas as pl
from jax.experimental.pallas import tpu as pltpu


# --------------------------------------------------------------------------
# Kernel A: per-core accumulator acc[0, m*D + d'] = sum_n tanh(fc(h))[n, m, d']
#   grid = (n_cores "parallel", steps "arbitrary"); output block stays
#   resident per core across the reduction axis.
# --------------------------------------------------------------------------
def _w_kernel(h_ref, wbd_ref, b_ref, acc_ref, *, num_blocks, guard):
    core = pl.program_id(0)
    step = pl.program_id(1)

    @pl.when(step == 0)
    def _():
        acc_ref[...] = jnp.zeros_like(acc_ref)

    def _accumulate():
        x = h_ref[...]                                   # (TN, M*D), h's dtype
        # Single lane-dense MXU matmul against the block-diagonal W^T;
        # f32 accumulation regardless of the streaming dtype of h.
        y = jnp.tanh(
            jnp.dot(x, wbd_ref[...], preferred_element_type=jnp.float32)
            + b_ref[...]
        )                                                # (TN, M*D) f32
        acc_ref[...] += jnp.sum(y, axis=0, keepdims=True)[None]   # (1,1,M*D)

    if guard:
        # Odd block count split across 2 cores: the clamped duplicate block on
        # the last step of core 1 is fetched but not accumulated.
        blk = core * pl.num_programs(1) + step
        pl.when(blk < num_blocks)(_accumulate)
    else:
        _accumulate()


# --------------------------------------------------------------------------
# Kernel B: z = h_wide @ Bmat, Bmat[m*D+d, d'] = beta[m] * (d == d').
# --------------------------------------------------------------------------
def _z_kernel(h_ref, bmat_ref, z_ref):
    z = jnp.dot(h_ref[...], bmat_ref[...], preferred_element_type=jnp.float32)
    z_ref[...] = z.astype(z_ref.dtype)


# --------------------------------------------------------------------------
# Tiling / budget helpers
# --------------------------------------------------------------------------
def _tpu_budget():
    """(target_block_bytes, vmem_ceiling_bytes) chosen per TPU generation."""
    try:
        vmem = int(getattr(pltpu.get_tpu_info(), "vmem_capacity_bytes", 0) or 0)
    except Exception:
        vmem = 0
    if vmem >= (100 << 20):        # v5e / v6e: 128 MiB physical VMEM
        return 12 << 20, 96 << 20
    return 6 << 20, 48 << 20       # v7x (64 MiB physical) or unknown: stay tight


def _pick_tn(n_rows, bytes_per_row, *, target_bytes, min_blocks=8):
    """Largest divisor of n_rows that (a) keeps the sublane dim a multiple of 8
    (or covers the full array), (b) fits the per-block byte budget, and
    (c) leaves at least `min_blocks` grid steps for pipelining / 2-TC split
    whenever n_rows allows it."""
    cands = [t for t in range(1, n_rows + 1)
             if n_rows % t == 0 and (t % 8 == 0 or t == n_rows)]
    fit = [t for t in cands if t * bytes_per_row <= target_bytes]
    deep = [t for t in fit if n_rows // t >= min_blocks]
    if deep:
        return max(deep)
    if fit:
        return max(fit)
    return min(cands)


def _vmem_limit(footprint_bytes, ceiling_bytes):
    return int(min(max(int(1.5 * footprint_bytes) + (2 << 20), 16 << 20),
                   ceiling_bytes))


# --------------------------------------------------------------------------
# Forward wrapper
# --------------------------------------------------------------------------
def attention_forward(h, fc_weight, fc_bias, attn, *, tn_w=None, tn_z=None,
                      target_block_bytes=None):
    """h: (N, M, D); fc_weight: (D, D); fc_bias: (D,); attn: (1, D)."""
    N, M, D = h.shape
    MD = M * D
    itemsize = jnp.dtype(h.dtype).itemsize
    bytes_per_vertex = MD * itemsize

    target, vmem_ceiling = _tpu_budget()
    if target_block_bytes is not None:
        target = target_block_bytes
    if tn_w is None:
        tn_w = _pick_tn(N, bytes_per_vertex, target_bytes=target)
    if tn_z is None:
        tn_z = _pick_tn(N, bytes_per_vertex, target_bytes=target)
    assert N % tn_w == 0 and N % tn_z == 0

    # Lane-dense flat view of h (row-major collapse -> no HBM data movement).
    h_wide = h.reshape(N, MD)

    wdt = h.dtype                       # stream-matching dtype for matmul operands
    wsize = jnp.dtype(wdt).itemsize
    # Block-diagonal W^T:  wbd[m*D+d, m*D+d'] = fc_weight[d', d]
    wbd = jnp.kron(jnp.eye(M, dtype=jnp.float32),
                   fc_weight.T.astype(jnp.float32)).astype(wdt)     # (MD, MD)
    b_tiled = jnp.tile(fc_bias.astype(jnp.float32).reshape(1, D), (1, M))  # (1, MD)

    # ---- Kernel A: per-metapath projected sums, split across TensorCores ----
    num_blocks = N // tn_w
    n_cores = 2 if num_blocks >= 2 else 1
    steps = -(-num_blocks // n_cores)
    guard = (n_cores * steps != num_blocks)

    if guard:
        h_index = lambda c, i: (jnp.minimum(c * steps + i, num_blocks - 1), 0)
    else:
        h_index = lambda c, i: (c * steps + i, 0)

    fp_a = 2 * (tn_w * MD * itemsize + MD * MD * wsize + MD * 4) \
        + 2 * n_cores * MD * 4
    cost_a = pl.CostEstimate(
        flops=int(2 * N * MD * MD + 2 * N * MD),
        transcendentals=int(N * MD),
        bytes_accessed=int(N * MD * itemsize + MD * MD * wsize + MD * 4
                           + n_cores * MD * 4),
    )

    w_partial = pl.pallas_call(
        functools.partial(_w_kernel, num_blocks=num_blocks, guard=guard),
        out_shape=jax.ShapeDtypeStruct((n_cores, 1, MD), jnp.float32),
        grid_spec=pltpu.PrefetchScalarGridSpec(
            num_scalar_prefetch=0,
            grid=(n_cores, steps),
            in_specs=[
                pl.BlockSpec((tn_w, MD), h_index),            # h (lane-dense)
                pl.BlockSpec((MD, MD), lambda c, i: (0, 0)),  # block-diag W^T
                pl.BlockSpec((1, MD), lambda c, i: (0, 0)),   # tiled bias
            ],
            out_specs=pl.BlockSpec((1, 1, MD), lambda c, i: (c, 0, 0)),
        ),
        compiler_params=pltpu.CompilerParams(
            dimension_semantics=("parallel", "arbitrary"),
            vmem_limit_bytes=_vmem_limit(fp_a, vmem_ceiling)),
        cost_estimate=cost_a,
    )(h_wide, wbd, b_tiled)

    # ---- Tiny finalize in plain JAX: attn dot, mean over N, softmax over M --
    acc = w_partial.sum(axis=0).reshape(M, D)                       # f32 (M, D)
    w = acc @ attn.reshape(D).astype(jnp.float32) / jnp.float32(N)  # (M,)
    beta = jax.nn.softmax(w)                                        # (M,)
    # Bmat[m*D + d, d'] = beta[m] * (d == d')
    bmat = (beta[:, None, None] *
            jnp.eye(D, dtype=jnp.float32)).reshape(MD, D).astype(wdt)

    # ---- Kernel B: beta-weighted reduction over M as one MXU matmul ---------
    fp_b = 2 * (tn_z * MD * itemsize + MD * D * wsize + tn_z * D * itemsize)
    cost_b = pl.CostEstimate(
        flops=int(2 * N * MD * D),
        transcendentals=0,
        bytes_accessed=int(N * MD * itemsize + MD * D * wsize
                           + N * D * itemsize),
    )

    z = pl.pallas_call(
        _z_kernel,
        out_shape=jax.ShapeDtypeStruct((N, D), h.dtype),
        grid_spec=pltpu.PrefetchScalarGridSpec(
            num_scalar_prefetch=0,
            grid=(N // tn_z,),
            in_specs=[
                pl.BlockSpec((tn_z, MD), lambda i: (i, 0)),   # h (lane-dense)
                pl.BlockSpec((MD, D), lambda i: (0, 0)),      # beta matrix
            ],
            out_specs=pl.BlockSpec((tn_z, D), lambda i: (i, 0)),
        ),
        compiler_params=pltpu.CompilerParams(
            dimension_semantics=("parallel",),
            vmem_limit_bytes=_vmem_limit(fp_b, vmem_ceiling)),
        cost_estimate=cost_b,
    )(h_wide, bmat)
    return z


def _reference(h, fc_weight, fc_bias, attn):
    w = jnp.tanh(h @ fc_weight.T + fc_bias).mean(axis=0) @ attn.T   # (M, 1)
    beta = jax.nn.softmax(w, axis=0)                                # (M, 1)
    return (beta[None, :, :] * h).sum(axis=1)                       # (N, D)


if __name__ == "__main__":
    N, M, D = 64, 4, 32
    key = jax.random.PRNGKey(0)
    k_h, k_w, k_b, k_a = jax.random.split(key, 4)

    # Deterministic parameter init mirroring the PyTorch module:
    #   xavier_normal_(fc.weight, gain=sqrt(2)); xavier_normal_(attn, gain=sqrt(2))
    gain = jnp.sqrt(2.0)
    std_fc = gain * jnp.sqrt(2.0 / (D + D))
    fc_weight = std_fc * jax.random.normal(k_w, (D, D), dtype=jnp.float32)
    bound = 1.0 / jnp.sqrt(jnp.float32(D))   # nn.Linear default bias init
    fc_bias = jax.random.uniform(k_b, (D,), minval=-bound, maxval=bound,
                                 dtype=jnp.float32)
    std_attn = gain * jnp.sqrt(2.0 / (1 + D))
    attn = std_attn * jax.random.normal(k_a, (1, D), dtype=jnp.float32)

    h = jax.random.normal(k_h, (N, M, D), dtype=jnp.float32)
    z_ref = _reference(h, fc_weight, fc_bias, attn)

    # 1) Auto tiles: 8 blocks -> 2 cores x 4 pipelined steps for kernel A,
    #    8 parallel blocks for kernel B.
    z1 = jax.block_until_ready(attention_forward(h, fc_weight, fc_bias, attn))

    # 2) Odd block count (5 blocks of 8 rows): exercises the index-map clamp
    #    and pl.when tail guard of the 2-core split plus multi-step accumulation.
    h_odd = h[:40]
    z_ref_odd = _reference(h_odd, fc_weight, fc_bias, attn)
    z2 = jax.block_until_ready(
        attention_forward(h_odd, fc_weight, fc_bias, attn, tn_w=8, tn_z=8))

    # 3) bf16 streaming of h (halves HBM traffic; matmuls accumulate in f32).
    z3 = jax.block_until_ready(
        attention_forward(h.astype(jnp.bfloat16), fc_weight, fc_bias, attn))

    assert z1.shape == (N, D)
    assert jnp.allclose(z1, z_ref, atol=1e-4, rtol=1e-4), (
        f"max abs err = {jnp.max(jnp.abs(z1 - z_ref))}")
    assert z2.shape == (40, D)
    assert jnp.allclose(z2, z_ref_odd, atol=1e-4, rtol=1e-4), (
        f"max abs err = {jnp.max(jnp.abs(z2 - z_ref_odd))}")
    assert z3.shape == (N, D) and z3.dtype == jnp.bfloat16
    assert jnp.allclose(z3.astype(jnp.float32), z_ref, atol=6e-2, rtol=6e-2), (
        f"max abs err = {jnp.max(jnp.abs(z3.astype(jnp.float32) - z_ref))}")

    print("KERNEL_OK")
</pallas_src>

<mosaic_0001>
module attributes {stable_mosaic.version = 11 : i64} {
  func.func @_w_kernel(%arg0: i32, %arg1: i32, %arg2: memref<8x128xf32, #tpu.memory_space<vmem>>, %arg3: memref<128x128xf32, #tpu.memory_space<vmem>>, %arg4: memref<1x128xf32, #tpu.memory_space<vmem>>, %arg5: memref<1x1x128xf32, #tpu.memory_space<vmem>>) attributes {dimension_semantics = [#tpu.dimension_semantics<parallel>, #tpu.dimension_semantics<arbitrary>], iteration_bounds = array<i64: 2, 4>, scalar_prefetch = 0 : i64, scratch_operands = 0 : i64, tpu.core_type = #tpu.core_type<tc>, window_params = [{transform_indices = @transform_0, window_bounds = array<i64: 8, 128>}, {pipeline_mode = #tpu.pipeline_mode<synchronous>, transform_indices = @transform_1, window_bounds = array<i64: 128, 128>}, {pipeline_mode = #tpu.pipeline_mode<synchronous>, transform_indices = @transform_2, window_bounds = array<i64: 1, 128>}, {transform_indices = @transform_3, window_bounds = array<i64: 1, 1, 128>}]} {
    %c0_i32 = arith.constant 0 : i32
    %0 = arith.cmpi eq, %arg1, %c0_i32 : i32
    %1 = arith.extui %0 : i1 to i32
    %c0_i32_0 = arith.constant 0 : i32
    %2 = arith.cmpi ne, %1, %c0_i32_0 : i32
    scf.if %2 {
      %cst_13 = arith.constant 0.000000e+00 : f32
      %16 = vector.broadcast %cst_13 : f32 to vector<1x1x128xf32>
      %c0_14 = arith.constant 0 : index
      %c0_15 = arith.constant 0 : index
      %c0_16 = arith.constant 0 : index
      %17 = vector.load %arg5[%c0_14, %c0_15, %c0_16] : memref<1x1x128xf32, #tpu.memory_space<vmem>>, vector<1x1x128xf32>
      tpu.vector_store %arg5[%c0_14, %c0_15, %c0_16], %16 {strides = array<i32>} : memref<1x1x128xf32, #tpu.memory_space<vmem>>, vector<1x1x128xf32>,
    } else {
    }
    %c0 = arith.constant 0 : index
    %c0_1 = arith.constant 0 : index
    %3 = vector.load %arg2[%c0, %c0_1] : memref<8x128xf32, #tpu.memory_space<vmem>>, vector<8x128xf32>
    %c0_2 = arith.constant 0 : index
    %c0_3 = arith.constant 0 : index
    %4 = vector.load %arg3[%c0_2, %c0_3] : memref<128x128xf32, #tpu.memory_space<vmem>>, vector<128x128xf32>
    %cst = arith.constant dense<0.000000e+00> : vector<8x128xf32>
    %5 = tpu.matmul %3, %4, %cst {dimension_numbers = #tpu.dot_dimension_numbers<[1], [0], [0], [1], [0, 0, 1, 1], [], []>} : vector<8x128xf32>, vector<128x128xf32>, vector<8x128xf32> -> vector<8x128xf32>
    %c0_4 = arith.constant 0 : index
    %c0_5 = arith.constant 0 : index
    %6 = vector.load %arg4[%c0_4, %c0_5] : memref<1x128xf32, #tpu.memory_space<vmem>>, vector<1x128xf32>
    %7 = vector.broadcast %6 : vector<1x128xf32> to vector<8x128xf32>
    %8 = arith.addf %5, %7 : vector<8x128xf32>
    %9 = math.tanh %8 : vector<8x128xf32>
    %c0_6 = arith.constant 0 : index
    %c0_7 = arith.constant 0 : index
    %c0_8 = arith.constant 0 : index
    %10 = vector.load %arg5[%c0_6, %c0_7, %c0_8] : memref<1x1x128xf32, #tpu.memory_space<vmem>>, vector<1x1x128xf32>
    %cst_9 = arith.constant dense<0.000000e+00> : vector<128xf32>
    %11 = vector.multi_reduction <add>, %9, %cst_9 [0] : vector<8x128xf32> to vector<128xf32>
    %12 = vector.shape_cast %11 : vector<128xf32> to vector<1x128xf32>
    %13 = vector.shape_cast %12 : vector<1x128xf32> to vector<1x1x128xf32>
    %14 = arith.addf %10, %13 : vector<1x1x128xf32>
    %c0_10 = arith.constant 0 : index
    %c0_11 = arith.constant 0 : index
    %c0_12 = arith.constant 0 : index
    %15 = vector.load %arg5[%c0_10, %c0_11, %c0_12] : memref<1x1x128xf32, #tpu.memory_space<vmem>>, vector<1x1x128xf32>
    tpu.vector_store %arg5[%c0_10, %c0_11, %c0_12], %14 {strides = array<i32>} : memref<1x1x128xf32, #tpu.memory_space<vmem>>, vector<1x1x128xf32>,
    return
  }
  func.func @transform_0(%arg0: i32, %arg1: i32) -> (i32, i32) {
    %c4_i32 = arith.constant 4 : i32
    %0 = arith.muli %arg0, %c4_i32 : i32
    %1 = arith.addi %0, %arg1 : i32
    %c0_i32 = arith.constant 0 : i32
    %c0_i32_0 = arith.constant 0 : i32
    return %1, %c0_i32 : i32, i32
  }
  func.func @transform_1(%arg0: i32, %arg1: i32) -> (i32, i32) {
    %c0_i32 = arith.constant 0 : i32
    %c0_i32_0 = arith.constant 0 : i32
    %c0_i32_1 = arith.constant 0 : i32
    return %c0_i32, %c0_i32_0 : i32, i32
  }
  func.func @transform_2(%arg0: i32, %arg1: i32) -> (i32, i32) {
    %c0_i32 = arith.constant 0 : i32
    %c0_i32_0 = arith.constant 0 : i32
    %c0_i32_1 = arith.constant 0 : i32
    return %c0_i32, %c0_i32_0 : i32, i32
  }
  func.func @transform_3(%arg0: i32, %arg1: i32) -> (i32, i32, i32) {
    %c0_i32 = arith.constant 0 : i32
    %c0_i32_0 = arith.constant 0 : i32
    %c0_i32_1 = arith.constant 0 : i32
    return %arg0, %c0_i32, %c0_i32_0 : i32, i32, i32
  }
}

</mosaic_0001>

<llo_original>
// kernel: tpu_custom_call.1
$region0: #{tpu_custom_call.1}
  #allocation0 [shape = 'u32[]', space=smem, size = 0x4, offset = 0x4, fixed_abs, tag = 'smem constant byte address 0x4 - core index']
  #allocation1 [shape = 'u32[144,128]{1,0:T(1,128)}', space=vmem, size = 0x12000, scoped, tag = 'internal scratch']
  %s0 = inlined_call_operand.hbm [shape: f32[64,128], index: 0, kind: input, shape index: {}]
  %s1 = inlined_call_operand.hbm [shape: f32[128,128], index: 1, kind: input, shape index: {}]
  %s2 = inlined_call_operand.vmem [shape: f32[1,128], index: 2, kind: input, shape index: {}]
  %s3 = inlined_call_operand.hbm [shape: f32[2,1,128], index: 3, kind: output, shape index: {}]
  %s4 = sld [smem:[#allocation0]]
  $region57: #{tpu_custom_call.1} parent=0
    _
  %s6 = ssub.s32 1, %s4
  %s7 = scalar_select 0, %s6, %s4
  $region1: #{tpu_custom_call.1} parent=0
    #allocation2 [shape = 'u8[8192]{0}', space=vmem, size = 0x2000, scoped, tag = 'input window, operand 0']
    #allocation3 [shape = 's32[2]{0}', space=sflag, size = 0x8, scoped, tag = 'scoped memory for tpu_custom_call.1']
    #allocation4 [shape = 's32[2]{0}', space=sflag, size = 0x8, scoped, tag = 'scoped memory for tpu_custom_call.1']
    #allocation5 [shape = 'u8[65536]{0}', space=vmem, size = 0x10000, scoped, tag = 'input window, operand 1, single buffered']
    #allocation6 [shape = 's32[1]{0}', space=sflag, size = 0x4, scoped, tag = 'scoped memory for tpu_custom_call.1']
    #allocation7 [shape = 'u8[1024]{0}', space=vmem, size = 0x400, scoped, tag = 'output window, operand 0']
    %8 = vsyncpa [#allocation3], 0
    %s9 = scalar_lea.sflag [#allocation3], 1
    %10 = vsyncpa %s9, 0
    %11 = vsyncpa [#allocation6], 0
    %12 = vsyncpa [#allocation4], 0
    %s13 = scalar_lea.sflag [#allocation4], 1
    %14 = vsyncpa %s13, 0
    loop: start=0, step=1, limit=10
    $region2: #{tpu_custom_call.1} parent=1 // loop_pre_header
      _
    $region3: #{tpu_custom_call.1} parent=1 // loop_header
      %s16 = sphi 0, %s20
      %p17 = scmp.ge.s32.totalorder %s16, 10
      %s23 = sphi 0, %s35
      %s24 = sphi 0, %s31
      %s25 = sphi 0, %s23
      %s26 = sphi 0, %s24
      %s27 = sphi 0, %s25
      %s28 = sphi 0, %s26
      %s42 = sphi 0, %s44
      %s45 = sphi 0, %s42
      %s46 = sphi 0, %s45
      %s62 = sphi 0, %s46
      %s66 = sphi 0, %s66
      %s68 = sphi 0, %s66
      %s69 = sphi 0, %s68
      %s83 = sphi 0, %s69
      %s87 = sphi 0, %s87
      %s89 = sphi 0, %s87
      %s90 = sphi 0, %s89
      %s104 = sphi 0, %s90
      %s110 = sphi 0, %s112
      %s113 = sphi 0, %s110
      %s114 = sphi 0, %s113
      %s130 = sphi 0, %s114
    $region4: #{tpu_custom_call.1} parent=1 // loop_header_branch
      %19 = sbr.rel (%p17) target = $region8
    $region5: #{tpu_custom_call.1} parent=1 // loop_body
      %s21 = ssub.s32 %s16, 1
      %s22 = ssub.s32 %s16, 2
      %s29 = sadd.s32 1, %s24
      %p30 = scmp.ge.s32.totalorder %s29, 4
      %s31 = scalar_select %p30, 0, %s29
      %s32 = sadd.s32 1, %s23
      %s33 = scalar_select %p30, %s32, %s23
      %p34 = scmp.ge.s32.totalorder %s33, 2
      %s35 = scalar_select %p34, 0, %s33
      %s36 = smul.u32 %s23, 4
      %s37 = sadd.s32 %s36, %s24
      %s38 = smul.u32 %s35, 4
      %s39 = sadd.s32 %s38, %s31
      %s40 = ssub.s32 %s37, %s39
      %p41 = scmp.eq.s32.totalorder %s40, 0
      %s43 = sadd.s32 %s42, 1
      %s44 = scalar_select %p41, %s42, %s43
      %p47 = pneg %p41
      %p48 = scmp.eq.s32.totalorder %s16, 7
      %p49 = por %p47, %p48
      %p50 = scmp.ne.s32.totalorder %s42, %s45
      %p51 = scmp.eq.s32.totalorder %s16, 0
      %p52 = por %p50, %p51
      %p53 = scmp.ne.s32.totalorder %s42, %s45
      %p54 = scmp.eq.s32.totalorder %s21, 7
      %p55 = por %p53, %p54
      %p56 = scmp.ne.s32.totalorder %s45, %s46
      %p57 = scmp.eq.s32.totalorder %s21, 0
      %p58 = por %p56, %p57
      %p59 = scmp.ne.s32.totalorder %s45, %s46
      %p60 = scmp.eq.s32.totalorder %s22, 7
      %p61 = por %p59, %p60
      %p63 = scmp.ne.s32.totalorder %s46, %s62
      %p64 = scmp.eq.s32.totalorder %s22, 0
      %p65 = por %p63, %p64
      %s67 = sadd.s32 %s66, 1
      %p70 = scmp.eq.s32.totalorder %s16, 7
      %p71 = scmp.ne.s32.totalorder %s66, %s68
      %p72 = scmp.eq.s32.totalorder %s16, 0
      %p73 = por %p71, %p72
      %p74 = scmp.ne.s32.totalorder %s66, %s68
      %p75 = scmp.eq.s32.totalorder %s21, 7
      %p76 = por %p74, %p75
      %p77 = scmp.ne.s32.totalorder %s68, %s69
      %p78 = scmp.eq.s32.totalorder %s21, 0
      %p79 = por %p77, %p78
      %p80 = scmp.ne.s32.totalorder %s68, %s69
      %p81 = scmp.eq.s32.totalorder %s22, 7
      %p82 = por %p80, %p81
      %p84 = scmp.ne.s32.totalorder %s69, %s83
      %p85 = scmp.eq.s32.totalorder %s22, 0
      %p86 = por %p84, %p85
      %s88 = sadd.s32 %s87, 1
      %p91 = scmp.eq.s32.totalorder %s16, 7
      %p92 = scmp.ne.s32.totalorder %s87, %s89
      %p93 = scmp.eq.s32.totalorder %s16, 0
      %p94 = por %p92, %p93
      %p95 = scmp.ne.s32.totalorder %s87, %s89
      %p96 = scmp.eq.s32.totalorder %s21, 7
      %p97 = por %p95, %p96
      %p98 = scmp.ne.s32.totalorder %s89, %s90
      %p99 = scmp.eq.s32.totalorder %s21, 0
      %p100 = por %p98, %p99
      %p101 = scmp.ne.s32.totalorder %s89, %s90
      %p102 = scmp.eq.s32.totalorder %s22, 7
      %p103 = por %p101, %p102
      %p105 = scmp.ne.s32.totalorder %s90, %s104
      %p106 = scmp.eq.s32.totalorder %s22, 0
      %p107 = por %p105, %p106
      %s108 = ssub.s32 %s23, %s35
      %p109 = scmp.eq.s32.totalorder %s108, 0
      %s111 = sadd.s32 %s110, 1
      %s112 = scalar_select %p109, %s110, %s111
      %p115 = pneg %p109
      %p116 = scmp.eq.s32.totalorder %s16, 7
      %p117 = por %p115, %p116
      %p118 = scmp.ne.s32.totalorder %s110, %s113
      %p119 = scmp.eq.s32.totalorder %s16, 0
      %p120 = por %p118, %p119
      %p121 = scmp.ne.s32.totalorder %s110, %s113
      %p122 = scmp.eq.s32.totalorder %s21, 7
      %p123 = por %p121, %p122
      %p124 = scmp.ne.s32.totalorder %s113, %s114
      %p125 = scmp.eq.s32.totalorder %s21, 0
      %p126 = por %p124, %p125
      %p127 = scmp.ne.s32.totalorder %s113, %s114
      %p128 = scmp.eq.s32.totalorder %s22, 7
      %p129 = por %p127, %p128
      %p131 = scmp.ne.s32.totalorder %s114, %s130
      %p132 = scmp.eq.s32.totalorder %s22, 0
      %p133 = por %p131, %p132
      %p134 = scmp.le.s32.totalorder 1, %s16
      %p135 = scmp.lt.s32.totalorder %s16, 9
      %p136 = pnand %p134, %p135
      %p137 = pneg %p136
      // Predicated region
      $region9: #{tpu_custom_call.1} parent=5 // pred_check
        _
      $region10: #{tpu_custom_call.1} parent=5 // pred_check_branch
        %139 = sbr.rel (%p136) target = $region12
      $region11: #{tpu_custom_call.1} parent=5 // pred_region
        %s140 = ssub.s32 %s16, 1
        // Predicated region
        $region13: #{tpu_custom_call.1} parent=11 // pred_check
          %p141 = pneg %p79
        $region14: #{tpu_custom_call.1} parent=11 // pred_check_branch
          %143 = sbr.rel (%p141) target = $region16
        $region15: #{tpu_custom_call.1} parent=11 // pred_region
          %s145 = ssub.s32 2048, 2048
          %146 = vsyncadd [#allocation6], %s145
          %s147 = sshll.u32 [#allocation5], 4
          %s148 = int_to_ptr.vmem [resolvable:$true] %s147
          %153 = dma.hbm_to_vmem [thread:$0]  %s1, 2048, %s148, [#allocation6], 128, 128, 8
        $region16: #{tpu_custom_call.1} parent=11 // pred_fallthru
          _
        // Predicated region
        $region17: #{tpu_custom_call.1} parent=11 // pred_check
          %p154 = pneg %p100
        $region18: #{tpu_custom_call.1} parent=11 // pred_check_branch
          %156 = sbr.rel (%p154) target = $region20
        $region19: #{tpu_custom_call.1} parent=11 // pred_region
          _
        $region20: #{tpu_custom_call.1} parent=11 // pred_fallthru
          _
      $region12: #{tpu_custom_call.1} parent=5 // pred_fallthru
        _
      %p157 = scmp.lt.s32.totalorder %s16, 8
      // Predicated region
      $region21: #{tpu_custom_call.1} parent=5 // pred_check
        %p158 = pneg %p157
      $region22: #{tpu_custom_call.1} parent=5 // pred_check_branch
        %160 = sbr.rel (%p158) target = $region24
      $region23: #{tpu_custom_call.1} parent=5 // pred_region
        // Predicated region
        $region25: #{tpu_custom_call.1} parent=23 // pred_check
          %p161 = pneg %p52
        $region26: #{tpu_custom_call.1} parent=23 // pred_check_branch
          %163 = sbr.rel (%p161) target = $region28
        $region27: #{tpu_custom_call.1} parent=23 // pred_region
          %s164 = sand.u32 %s42, 1
          %s165 = scalar_lea.sflag [#allocation3], %s164
          %s166 = sand.u32 %s42, 1
          %s167 = smul.addr %s166, 8
          %s168 = scalar_lea.vmem [#allocation2], %s167
          %s169 = smul.u32 %s23, 4
          %s170 = sadd.s32 %s169, %s24
          %s172 = ssub.s32 128, 128
          %173 = vsyncadd %s165, %s172
          %s174 = smul.addr %s170, 128
          %s175 = scalar_lea.hbm %s0, %s174
          %s177 = sshll.u32 %s168, 4
          %s178 = int_to_ptr.vmem [resolvable:$true] %s177
          %180 = dma.hbm_to_vmem [thread:$0]  %s175, 128, %s178, %s165
        $region28: #{tpu_custom_call.1} parent=23 // pred_fallthru
          _
      $region24: #{tpu_custom_call.1} parent=5 // pred_fallthru
        _
      %p181 = scmp.le.s32.totalorder 1, %s16
      %p182 = scmp.lt.s32.totalorder %s16, 9
      %p183 = pnand %p181, %p182
      %p184 = pneg %p183
      // Predicated region
      $region29: #{tpu_custom_call.1} parent=5 // pred_check
        _
      $region30: #{tpu_custom_call.1} parent=5 // pred_check_branch
        %186 = sbr.rel (%p183) target = $region32
      $region31: #{tpu_custom_call.1} parent=5 // pred_region
        %s187 = ssub.s32 %s16, 1
        %s188 = sand.u32 %s45, 1
        %s189 = scalar_lea.sflag [#allocation3], %s188
        %s190 = sand.u32 %s45, 1
        %s191 = smul.addr %s190, 8
        %s192 = scalar_lea.vmem [#allocation2], %s191
        // Predicated region
        $region33: #{tpu_custom_call.1} parent=31 // pred_check
          %p193 = pneg %p58
        $region34: #{tpu_custom_call.1} parent=31 // pred_check_branch
          %195 = sbr.rel (%p193) target = $region36
        $region35: #{tpu_custom_call.1} parent=31 // pred_region
          %196 = dma.done %s189, 128
        $region36: #{tpu_custom_call.1} parent=31 // pred_fallthru
          _
        // Predicated region
        $region37: #{tpu_custom_call.1} parent=31 // pred_check
          %p197 = pneg %p79
        $region38: #{tpu_custom_call.1} parent=31 // pred_check_branch
          %199 = sbr.rel (%p197) target = $region40
        $region39: #{tpu_custom_call.1} parent=31 // pred_region
          %200 = dma.done [#allocation6], 2048
        $region40: #{tpu_custom_call.1} parent=31 // pred_fallthru
          _
        %s201 = sand.u32 %s45, 1
        %s202 = scalar_lea.sflag [#allocation3], %s201
        %s203 = sand.u32 %s45, 1
        %s204 = smul.addr %s203, 8
        %s205 = scalar_lea.vmem [#allocation2], %s204
        %p206 = pneg %p58
        %p207 = pneg %p55
        %p208 = pneg %p79
        %p209 = pneg %p76
        %p210 = pneg %p100
        %p211 = pneg %p97
        %p212 = pneg %p126
        %p213 = pneg %p123
        %s214 = sand.u32 %s113, 1
        %s215 = scalar_lea.sflag [#allocation4], %s214
        %s216 = sand.u32 %s113, 1
        %s217 = scalar_lea.vmem [#allocation7], %s216
        %s218 = smul.u32 %s25, 4
        %s219 = sadd.s32 %s218, %s26
        %p220 = scmp.eq.s32.totalorder %s26, 0
        // Predicated region
        $region41: #{tpu_custom_call.1} parent=31 // pred_check
          %p221 = pneg %p220
        $region42: #{tpu_custom_call.1} parent=31 // pred_check_branch
          %223 = sbr.rel (%p221) target = $region44
        $region43: #{tpu_custom_call.1} parent=31 // pred_region
          %224 = vst [vmem:[%s217] sm:$0x1] 0.0
        $region44: #{tpu_custom_call.1} parent=31 // pred_fallthru
          _
        %v225 = vld [vmem:[%s192] sm:$0xff]
        %v226 = vld [vmem:[#allocation5] sm:$0xff]
        %v227 = vld [vmem:[#allocation5 + $0x8] sm:$0xff]
        %v228 = vld [vmem:[#allocation5 + $0x10] sm:$0xff]
        %v229 = vld [vmem:[#allocation5 + $0x18] sm:$0xff]
        %v230 = vld [vmem:[#allocation5 + $0x20] sm:$0xff]
        %v231 = vld [vmem:[#allocation5 + $0x28] sm:$0xff]
        %v232 = vld [vmem:[#allocation5 + $0x30] sm:$0xff]
        %v233 = vld [vmem:[#allocation5 + $0x38] sm:$0xff]
        %v234 = vld [vmem:[#allocation5 + $0x40] sm:$0xff]
        %v235 = vld [vmem:[#allocation5 + $0x48] sm:$0xff]
        %v236 = vld [vmem:[#allocation5 + $0x50] sm:$0xff]
        %v237 = vld [vmem:[#allocation5 + $0x58] sm:$0xff]
        %v238 = vld [vmem:[#allocation5 + $0x60] sm:$0xff]
        %v239 = vld [vmem:[#allocation5 + $0x68] sm:$0xff]
        %v240 = vld [vmem:[#allocation5 + $0x70] sm:$0xff]
        %v241 = vld [vmem:[#allocation5 + $0x78] sm:$0xff]
        %v242 = vld [vmem:[%s2] sm:$0x1]
        %v244 = vlaneseq
        %v245 = vshrl.u32 %v244, 7
        %v246 = vsub.s32 0, %v245
        %v247 = vrot.slane %v242, %v246
        %249 = vmatprep.subr.mxu0 0.0
        %250 = vmatpush1.msra.mxu0 %v241
        %251 = vmatprep.subr.mxu0 0.0
        %252 = vmatpush1.msra.mxu0 %v240
        %253 = vmatprep.subr.mxu0 0.0
        %254 = vmatpush1.msra.mxu0 %v239
        %255 = vmatprep.subr.mxu0 0.0
        %256 = vmatpush1.msra.mxu0 %v238
        %257 = vmatprep.subr.mxu0 0.0
        %258 = vmatpush1.msra.mxu0 %v237
        %259 = vmatprep.subr.mxu0 0.0
        %260 = vmatpush1.msra.mxu0 %v236
        %261 = vmatprep.subr.mxu0 0.0
        %262 = vmatpush1.msra.mxu0 %v235
        %263 = vmatprep.subr.mxu0 0.0
        %264 = vmatpush1.msra.mxu0 %v234
        %265 = vmatprep.subr.mxu0 0.0
        %266 = vmatpush1.msra.mxu0 %v233
        %267 = vmatprep.subr.mxu0 0.0
        %268 = vmatpush1.msra.mxu0 %v232
        %269 = vmatprep.subr.mxu0 0.0
        %270 = vmatpush1.msra.mxu0 %v231
        %271 = vmatprep.subr.mxu0 0.0
        %272 = vmatpush1.msra.mxu0 %v230
        %273 = vmatprep.subr.mxu0 0.0
        %274 = vmatpush1.msra.mxu0 %v229
        %275 = vmatprep.subr.mxu0 0.0
        %276 = vmatpush1.msra.mxu0 %v228
        %277 = vmatprep.subr.mxu0 0.0
        %278 = vmatpush1.msra.mxu0 %v227
        %279 = vmatprep.subr.mxu0 0.0
        %280 = vmatpush1.msra.mxu0 %v226
        %281 = vmatprep.subr.mxu0 0.0
        %282 = vmatpush2.msra.mxu0 0.0
        %283 = vmatprep.subr.mxu0 0.0
        %284 = vmatpush2.msra.mxu0 0.0
        %285 = vmatprep.subr.mxu0 0.0
        %286 = vmatpush2.msra.mxu0 0.0
        %287 = vmatprep.subr.mxu0 0.0
        %288 = vmatpush2.msra.mxu0 0.0
        %289 = vmatprep.subr.mxu0 0.0
        %290 = vmatpush2.msra.mxu0 0.0
        %291 = vmatprep.subr.mxu0 0.0
        %292 = vmatpush2.msra.mxu0 0.0
        %293 = vmatprep.subr.mxu0 0.0
        %294 = vmatpush2.msra.mxu0 0.0
        %295 = vmatprep.subr.mxu0 0.0
        %296 = vmatpush2.msra.mxu0 0.0
        %297 = vmatprep.subr.mxu0 0.0
        %298 = vmatpush2.msra.mxu0 0.0
        %299 = vmatprep.subr.mxu0 0.0
        %300 = vmatpush2.msra.mxu0 0.0
        %301 = vmatprep.subr.mxu0 0.0
        %302 = vmatpush2.msra.mxu0 0.0
        %303 = vmatprep.subr.mxu0 0.0
        %304 = vmatpush2.msra.mxu0 0.0
        %305 = vmatprep.subr.mxu0 0.0
        %306 = vmatpush2.msra.mxu0 0.0
        %307 = vmatprep.subr.mxu0 0.0
        %308 = vmatpush2.msra.mxu0 0.0
        %309 = vmatprep.subr.mxu0 0.0
        %310 = vmatpush2.msra.mxu0 0.0
        %311 = vmatprep.subr.mxu0 0.0
        %312 = vmatpush2.msra.mxu0 0.0
        %313 = vmatprep.mubr.f32.mxu0 0.0
        %314 = vmatmul.mubr.f32.gmra.mxu0 %v225
        %v315 = vpop.f32.mrf.mxu0
        %v316 = vadd.f32 %v247, %v315
        %v317 = vpop.f32.mrf.mxu0
        %318 = vdwg.mxu0
        %v319 = vtanh.pop %v316
        %v320 = vld [vmem:[%s217] sm:$0x1]
        %v321 = vrot.slane %v319, 4
        %v322 = vadd.f32 %v319, %v321
        %v323 = vrot.slane %v322, 2
        %v324 = vadd.f32 %v322, %v323
        %v325 = vrot.slane %v324, 1
        %v326 = vadd.f32 %v324, %v325
        %v327 = vadd.f32 %v320, %v326
        %328 = vst [vmem:[%s217] sm:$0x1] %v327
        %s329 = sand.u32 %s113, 1
        %s330 = scalar_lea.sflag [#allocation4], %s329
        %s331 = sand.u32 %s113, 1
        %s332 = scalar_lea.vmem [#allocation7], %s331
        // Predicated region
        $region45: #{tpu_custom_call.1} parent=31 // pred_check
          %p333 = pneg %p123
        $region46: #{tpu_custom_call.1} parent=31 // pred_check_branch
          %335 = sbr.rel (%p333) target = $region48
        $region47: #{tpu_custom_call.1} parent=31 // pred_region
          %s337 = ssub.s32 16, 16
          %338 = vsyncadd %s330, %s337
          %s339 = smul.addr %s25, 16
          %s340 = scalar_lea.hbm %s3, %s339
          %s342 = sshll.u32 %s332, 4
          %s343 = int_to_ptr.vmem [resolvable:$true] %s342
          %345 = dma.vmem_to_hbm [thread:$0]  %s343, 16, %s340, %s330
        $region48: #{tpu_custom_call.1} parent=31 // pred_fallthru
          _
      $region32: #{tpu_custom_call.1} parent=5 // pred_fallthru
        _
      %p346 = scmp.le.s32.totalorder 2, %s16
      // Predicated region
      $region49: #{tpu_custom_call.1} parent=5 // pred_check
        %p347 = pneg %p346
      $region50: #{tpu_custom_call.1} parent=5 // pred_check_branch
        %349 = sbr.rel (%p347) target = $region52
      $region51: #{tpu_custom_call.1} parent=5 // pred_region
        %s350 = ssub.s32 %s16, 2
        // Predicated region
        $region53: #{tpu_custom_call.1} parent=51 // pred_check
          %p351 = pneg %p129
        $region54: #{tpu_custom_call.1} parent=51 // pred_check_branch
          %353 = sbr.rel (%p351) target = $region56
        $region55: #{tpu_custom_call.1} parent=51 // pred_region
          %s354 = sand.u32 %s114, 1
          %s355 = scalar_lea.sflag [#allocation4], %s354
          %s356 = sand.u32 %s114, 1
          %s357 = scalar_lea.vmem [#allocation7], %s356
          %358 = dma.done %s355, 16
        $region56: #{tpu_custom_call.1} parent=51 // pred_fallthru
          _
      $region52: #{tpu_custom_call.1} parent=5 // pred_fallthru
        _
    $region6: #{tpu_custom_call.1} parent=1 // loop_footer
      %s20 = sadd.s32 1, %s16
    $region7: #{tpu_custom_call.1} parent=1 // loop_footer_branch
      %15 = sbr.rel target = $region3
    $region8: #{tpu_custom_call.1} parent=1 // loop_exit
      _
    %359 = vsyncpa [#allocation3], 1
    %s360 = scalar_lea.sflag [#allocation3], 1
    %361 = vsyncpa %s360, 1
    %362 = vsyncpa [#allocation6], 1
    %363 = vsyncpa [#allocation4], 1
    %s364 = scalar_lea.sflag [#allocation4], 1
    %365 = vsyncpa %s364, 1

</llo_original>
